<compile_context>
chip_gen: v7x
topology: tpu7x:2x2x1
jax: 0.10.0
libtpu: 0.0.40
codegen_flags: <defaults>
</compile_context>

<pallas_src>
from typing import Callable, Optional

import jax
import jax.numpy as jnp
from jax.experimental import pallas as pl
from jax.experimental.pallas import tpu as pltpu


def _round_up(x: int, m: int) -> int:
    return (x + m - 1) // m * m


def _sublane_granule(dtype) -> int:
    """Rows per native sublane tile: 8 for f32, 16 for bf16, 32 for int8/fp8."""
    itemsize = max(1, jnp.dtype(dtype).itemsize)
    return 8 * max(1, 4 // itemsize)


def _vmem_budget_bytes() -> int:
    """Per-generation VMEM budget: ~96 MiB on v5e/v6e (128 MiB), ~48 MiB on v7x (64 MiB)."""
    try:
        cap = int(pltpu.get_tpu_info().vmem_capacity_bytes)
    except Exception:
        cap = 64 * 1024 * 1024
    return min(cap * 3 // 4, 96 * 1024 * 1024)


# ---------------------------------------------------------------------------
# Kernel A: weight-resident, single dot per M tile (no K loop, no scratch)
# ---------------------------------------------------------------------------
def _linear_resident_kernel(x_ref, w_ref, b_ref, o_ref):
    o_ref[...] = (
        jnp.dot(x_ref[...], w_ref[...], preferred_element_type=jnp.float32)
        + b_ref[...]
    ).astype(o_ref.dtype)


# ---------------------------------------------------------------------------
# Kernel B: general (M, N, K) grid, f32 accumulator, bias folded into init
# ---------------------------------------------------------------------------
def _linear_tiled_kernel(x_ref, w_ref, b_ref, o_ref, acc_ref):
    @pl.when(pl.program_id(2) == 0)
    def _init():
        acc_ref[...] = jnp.broadcast_to(b_ref[...], acc_ref.shape)

    acc_ref[...] += jnp.dot(
        x_ref[...], w_ref[...], preferred_element_type=jnp.float32
    )

    @pl.when(pl.program_id(2) == pl.num_programs(2) - 1)
    def _finalize():
        o_ref[...] = acc_ref[...].astype(o_ref.dtype)


def _linear_weight_resident(x2d, wt, b_f32, out_dtype, budget, cost):
    rows, h_in = x2d.shape
    h_out = wt.shape[1]
    in_size = jnp.dtype(x2d.dtype).itemsize
    out_size = jnp.dtype(out_dtype).itemsize
    granule = max(_sublane_granule(x2d.dtype), _sublane_granule(out_dtype))

    # Pick the largest row tile that fits the (double-buffered) VMEM budget.
    fixed = 2 * h_in * h_out * in_size + 2 * h_out * 4          # weight + bias
    per_row = 2 * (h_in * in_size + h_out * out_size)           # x block + out block
    avail = int(budget * 0.8) - fixed
    tm_cap = max(granule, avail // max(per_row, 1)) if avail > 0 else granule
    tm_cap = min(tm_cap, 2048)

    if rows <= tm_cap:
        tm = rows                              # full-dim block: no divisibility rule
        grid_m = 1
    else:
        tm = max(granule, (tm_cap // granule) * granule)
        grid_m = pl.cdiv(rows, tm)             # last partial block masked by Pallas

    return pl.pallas_call(
        _linear_resident_kernel,
        out_shape=jax.ShapeDtypeStruct((rows, h_out), out_dtype),
        grid=(grid_m,),
        in_specs=[
            pl.BlockSpec((tm, h_in), lambda i: (i, 0)),      # activation row panel
            pl.BlockSpec((h_in, h_out), lambda i: (0, 0)),   # VMEM-resident weight
            pl.BlockSpec((1, h_out), lambda i: (0, 0)),      # f32 bias
        ],
        out_specs=pl.BlockSpec((tm, h_out), lambda i: (i, 0)),
        compiler_params=pltpu.CompilerParams(
            dimension_semantics=("parallel",),
            vmem_limit_bytes=budget,
        ),
        cost_estimate=cost,
    )(x2d, wt, b_f32)


def _linear_general(x2d, wt, b_f32, out_dtype, budget, cost):
    rows, h_in = x2d.shape
    h_out = wt.shape[1]
    granule = max(_sublane_granule(x2d.dtype), _sublane_granule(out_dtype))

    tm_cap = 2048 if budget >= 90 * 1024 * 1024 else 1024
    tm = min(tm_cap, _round_up(rows, granule))
    tn = min(512, _round_up(h_out, 128))
    tk = min(512, _round_up(h_in, 128))
    mp, np_, kp = _round_up(rows, tm), _round_up(h_out, tn), _round_up(h_in, tk)

    if (mp, kp) != (rows, h_in):
        x2d = jnp.pad(x2d, ((0, mp - rows), (0, kp - h_in)))
    if (kp, np_) != (h_in, h_out):
        wt = jnp.pad(wt, ((0, kp - h_in), (0, np_ - h_out)))
    if np_ != h_out:
        b_f32 = jnp.pad(b_f32, ((0, 0), (0, np_ - h_out)))

    grid = (mp // tm, np_ // tn, kp // tk)

    out = pl.pallas_call(
        _linear_tiled_kernel,
        out_shape=jax.ShapeDtypeStruct((mp, np_), out_dtype),
        grid_spec=pltpu.PrefetchScalarGridSpec(
            num_scalar_prefetch=0,
            grid=grid,
            in_specs=[
                pl.BlockSpec((tm, tk), lambda i, j, k: (i, k)),
                pl.BlockSpec((tk, tn), lambda i, j, k: (k, j)),
                pl.BlockSpec((1, tn), lambda i, j, k: (0, j)),
            ],
            out_specs=pl.BlockSpec((tm, tn), lambda i, j, k: (i, j)),
            scratch_shapes=[pltpu.VMEM((tm, tn), jnp.float32)],
        ),
        compiler_params=pltpu.CompilerParams(
            dimension_semantics=("parallel", "parallel", "arbitrary"),
            vmem_limit_bytes=budget,
        ),
        cost_estimate=cost,
    )(x2d, wt, b_f32)

    if (mp, np_) != (rows, h_out):
        out = out[:rows, :h_out]
    return out


def _pallas_linear(x2d: jax.Array, w: jax.Array, b: jax.Array, out_dtype) -> jax.Array:
    """x2d: (rows, H_in), w: (H_out, H_in) [PyTorch layout], b: (H_out,)."""
    rows, h_in = x2d.shape
    h_out = w.shape[0]
    dt = x2d.dtype
    in_size = jnp.dtype(dt).itemsize
    out_size = jnp.dtype(out_dtype).itemsize

    wt = jnp.swapaxes(w, 0, 1).astype(dt)              # (H_in, H_out), one-time transpose
    b_f32 = b.astype(jnp.float32).reshape(1, h_out)

    budget = _vmem_budget_bytes()
    weight_bytes = h_in * h_out * in_size
    cost = pl.CostEstimate(
        flops=2 * rows * h_in * h_out,
        transcendentals=0,
        bytes_accessed=(rows * h_in * in_size + weight_bytes
                        + h_out * 4 + rows * h_out * out_size),
    )

    if 2 * weight_bytes <= budget // 2:
        return _linear_weight_resident(x2d, wt, b_f32, out_dtype, budget, cost)
    return _linear_general(x2d, wt, b_f32, out_dtype, budget, cost)


def _linear(x2d, w, b, *, force_pallas=False, compute_dtype=None):
    rows, h_in = x2d.shape
    h_out = w.shape[0]
    out_dtype = x2d.dtype
    if compute_dtype is not None:
        # e.g. bf16 operands on v6e/v7x: halves HBM/VMEM traffic, f32 accumulation kept.
        x2d = x2d.astype(compute_dtype)
        w = w.astype(compute_dtype)
    flops = 2 * rows * h_in * h_out
    if not force_pallas and flops < int(1e8):
        # XLA fallback for small problems; f32 accumulation to stay consistent.
        y = jnp.dot(x2d, jnp.swapaxes(w, 0, 1), preferred_element_type=jnp.float32)
        return (y + b.astype(jnp.float32)).astype(out_dtype)
    return _pallas_linear(x2d, w, b, out_dtype)


# ---------------------------------------------------------------------------
# BatchFirstWrapper.forward semantics (inner module = Linear over last dim)
# ---------------------------------------------------------------------------
def batch_first_wrapper_forward(
    x: jax.Array,
    w: jax.Array,
    b: jax.Array,
    pre_transform: Optional[Callable[[jax.Array], jax.Array]] = None,
    post_transform: Optional[Callable[[jax.Array], jax.Array]] = None,
    *,
    force_pallas: bool = False,
    compute_dtype=None,
) -> jax.Array:
    # Default pre-step is .transpose(0,1).  A last-dim Linear commutes with that
    # transpose, so on the default path we do NOT materialize it (and the default
    # post-transpose cancels) — mathematically identical, 2x fewer HBM copies.
    default_pre_swap = pre_transform is None and x.ndim >= 3

    if pre_transform is not None:
        x = pre_transform(x)

    lead = x.shape[:-1]
    y2d = _linear(
        x.reshape(-1, x.shape[-1]), w, b,
        force_pallas=force_pallas, compute_dtype=compute_dtype,
    )
    y = y2d.reshape(*lead, w.shape[0])

    if default_pre_swap:
        if post_transform is not None:
            # Custom post hook expects the seq-first layout the inner module produced.
            y = post_transform(jnp.swapaxes(y, 0, 1))
        # else: default post .transpose(0,1) cancels the elided pre-transpose.
    else:
        if post_transform is not None:
            y = post_transform(y)
        elif y.ndim >= 3:
            y = jnp.swapaxes(y, 0, 1)
    return y


if __name__ == "__main__":
    B, S, H = 2, 8, 32                       # batch-first input: (B, S, H)

    key = jax.random.PRNGKey(0)
    kx, kw, kb = jax.random.split(key, 3)
    x = jax.random.normal(kx, (B, S, H), dtype=jnp.float32)
    # Deterministic nn.Linear(H, H)-shaped params (synthetic init, no checkpoint).
    w = jax.random.normal(kw, (H, H), dtype=jnp.float32) * (1.0 / jnp.sqrt(H))
    b = jax.random.normal(kb, (H,), dtype=jnp.float32) * 0.01

    # Full-precision reference (last-dim Linear; default transposes cancel).
    ref_bf = jnp.einsum("bsh,oh->bso", x, w,
                        precision=jax.lax.Precision.HIGHEST) + b     # batch-first
    ref_sf = jnp.swapaxes(ref_bf, 0, 1)                              # seq-first

    # --- default path (both transposes elided, Pallas weight-resident kernel) ---
    out = batch_first_wrapper_forward(x, w, b, force_pallas=True)
    out = jax.block_until_ready(out)
    assert out.shape == (B, S, H), out.shape
    assert jnp.allclose(out, ref_bf, atol=1e-4, rtol=1e-4)

    # --- custom post_transform path (module output presented seq-first) ---
    post = lambda t: t * 2.0
    out2 = batch_first_wrapper_forward(x, w, b, post_transform=post, force_pallas=True)
    out2 = jax.block_until_ready(out2)
    assert out2.shape == (S, B, H), out2.shape
    assert jnp.allclose(out2, ref_sf * 2.0, atol=1e-4, rtol=1e-4)

    # --- bf16-operand path (v6e/v7x: halved HBM traffic, f32 accumulation) ---
    out3 = batch_first_wrapper_forward(x, w, b, force_pallas=True,
                                       compute_dtype=jnp.bfloat16)
    out3 = jax.block_until_ready(out3)
    assert out3.shape == (B, S, H), out3.shape
    assert out3.dtype == x.dtype
    assert jnp.allclose(out3, ref_bf, atol=1e-1, rtol=1e-1)

    print("KERNEL_OK")
</pallas_src>

<mosaic_0001>
module attributes {stable_mosaic.version = 11 : i64} {
  func.func @_linear_resident_kernel(%arg0: i32, %arg1: memref<16x32xf32, #tpu.memory_space<vmem>>, %arg2: memref<32x32xf32, #tpu.memory_space<vmem>>, %arg3: memref<1x32xf32, #tpu.memory_space<vmem>>, %arg4: memref<16x32xf32, #tpu.memory_space<vmem>>) attributes {dimension_semantics = [#tpu.dimension_semantics<parallel>], iteration_bounds = array<i64: 1>, scalar_prefetch = 0 : i64, scratch_operands = 0 : i64, tpu.core_type = #tpu.core_type<tc>, window_params = [{transform_indices = @transform_0, window_bounds = array<i64: 16, 32>}, {pipeline_mode = #tpu.pipeline_mode<synchronous>, transform_indices = @transform_1, window_bounds = array<i64: 32, 32>}, {pipeline_mode = #tpu.pipeline_mode<synchronous>, transform_indices = @transform_2, window_bounds = array<i64: 1, 32>}, {transform_indices = @transform_3, window_bounds = array<i64: 16, 32>}]} {
    %c0 = arith.constant 0 : index
    %c0_0 = arith.constant 0 : index
    %0 = vector.load %arg1[%c0, %c0_0] : memref<16x32xf32, #tpu.memory_space<vmem>>, vector<16x32xf32>
    %c0_1 = arith.constant 0 : index
    %c0_2 = arith.constant 0 : index
    %1 = vector.load %arg2[%c0_1, %c0_2] : memref<32x32xf32, #tpu.memory_space<vmem>>, vector<32x32xf32>
    %cst = arith.constant dense<0.000000e+00> : vector<16x32xf32>
    %2 = tpu.matmul %0, %1, %cst {dimension_numbers = #tpu.dot_dimension_numbers<[1], [0], [0], [1], [0, 0, 1, 1], [], []>} : vector<16x32xf32>, vector<32x32xf32>, vector<16x32xf32> -> vector<16x32xf32>
    %c0_3 = arith.constant 0 : index
    %c0_4 = arith.constant 0 : index
    %3 = vector.load %arg3[%c0_3, %c0_4] : memref<1x32xf32, #tpu.memory_space<vmem>>, vector<1x32xf32>
    %4 = vector.broadcast %3 : vector<1x32xf32> to vector<16x32xf32>
    %5 = arith.addf %2, %4 : vector<16x32xf32>
    %c0_5 = arith.constant 0 : index
    %c0_6 = arith.constant 0 : index
    %6 = vector.load %arg4[%c0_5, %c0_6] : memref<16x32xf32, #tpu.memory_space<vmem>>, vector<16x32xf32>
    tpu.vector_store %arg4[%c0_5, %c0_6], %5 {strides = array<i32>} : memref<16x32xf32, #tpu.memory_space<vmem>>, vector<16x32xf32>,
    return
  }
  func.func @transform_0(%arg0: i32) -> (i32, i32) {
    %c0_i32 = arith.constant 0 : i32
    %c0_i32_0 = arith.constant 0 : i32
    return %arg0, %c0_i32 : i32, i32
  }
  func.func @transform_1(%arg0: i32) -> (i32, i32) {
    %c0_i32 = arith.constant 0 : i32
    %c0_i32_0 = arith.constant 0 : i32
    %c0_i32_1 = arith.constant 0 : i32
    return %c0_i32, %c0_i32_0 : i32, i32
  }
  func.func @transform_2(%arg0: i32) -> (i32, i32) {
    %c0_i32 = arith.constant 0 : i32
    %c0_i32_0 = arith.constant 0 : i32
    %c0_i32_1 = arith.constant 0 : i32
    return %c0_i32, %c0_i32_0 : i32, i32
  }
  func.func @transform_3(%arg0: i32) -> (i32, i32) {
    %c0_i32 = arith.constant 0 : i32
    %c0_i32_0 = arith.constant 0 : i32
    return %arg0, %c0_i32 : i32, i32
  }
}

</mosaic_0001>

<llo_original>
// kernel: tpu_custom_call.1
$region0: #{tpu_custom_call.1}
  #allocation0 [shape = 'u32[]', space=smem, size = 0x4, offset = 0x4, fixed_abs, tag = 'smem constant byte address 0x4 - core index']
  #allocation1 [shape = 'u32[144,128]{1,0:T(1,128)}', space=vmem, size = 0x12000, scoped, tag = 'internal scratch']
  %s0 = inlined_call_operand.hbm [shape: f32[16,32], index: 0, kind: input, shape index: {}]
  %s1 = inlined_call_operand.hbm [shape: f32[32,32], index: 1, kind: input, shape index: {}]
  %s2 = inlined_call_operand.vmem [shape: f32[1,32], index: 2, kind: input, shape index: {}]
  %s3 = inlined_call_operand.hbm [shape: f32[16,32], index: 3, kind: output, shape index: {}]
  %s4 = sld [smem:[#allocation0]]
  $region30: #{tpu_custom_call.1} parent=0
    _
  %s6 = ssub.s32 1, %s4
  %s7 = scalar_select 0, %s6, %s4
  $region1: #{tpu_custom_call.1} parent=0
    #allocation2 [shape = 'u8[8192]{0}', space=vmem, size = 0x2000, scoped, tag = 'input window, operand 0, single buffered']
    #allocation3 [shape = 's32[1]{0}', space=sflag, size = 0x4, scoped, tag = 'scoped memory for tpu_custom_call.1']
    #allocation4 [shape = 's32[1]{0}', space=sflag, size = 0x4, scoped, tag = 'scoped memory for tpu_custom_call.1']
    #allocation5 [shape = 'u8[16384]{0}', space=vmem, size = 0x4000, scoped, tag = 'input window, operand 1, single buffered']
    #allocation6 [shape = 's32[1]{0}', space=sflag, size = 0x4, scoped, tag = 'scoped memory for tpu_custom_call.1']
    #allocation7 [shape = 'u8[8192]{0}', space=vmem, size = 0x2000, scoped, tag = 'output window, operand 0, single buffered']
    %8 = vsyncpa [#allocation3], 0
    %9 = vsyncpa [#allocation6], 0
    %10 = vsyncpa [#allocation4], 0
    // Predicated region
    $region2: #{tpu_custom_call.1} parent=1 // pred_check
      _
    $region3: #{tpu_custom_call.1} parent=1 // pred_check_branch
      %12 = sbr.rel (0) target = $region5
    $region4: #{tpu_custom_call.1} parent=1 // pred_region
      %s14 = ssub.s32 256, 256
      %15 = vsyncadd [#allocation3], %s14
      %s16 = sshll.u32 [#allocation2], 4
      %s17 = int_to_ptr.vmem [resolvable:$true] %s16
      %22 = dma.hbm_to_vmem [thread:$0]  %s0, 256, %s17, [#allocation3], 128, 128, 8
    $region5: #{tpu_custom_call.1} parent=1 // pred_fallthru
      _
    // Predicated region
    $region6: #{tpu_custom_call.1} parent=1 // pred_check
      _
    $region7: #{tpu_custom_call.1} parent=1 // pred_check_branch
      %24 = sbr.rel (0) target = $region9
    $region8: #{tpu_custom_call.1} parent=1 // pred_region
      %s26 = ssub.s32 512, 512
      %27 = vsyncadd [#allocation6], %s26
      %s28 = sshll.u32 [#allocation5], 4
      %s29 = int_to_ptr.vmem [resolvable:$true] %s28
      %34 = dma.hbm_to_vmem [thread:$0]  %s1, 512, %s29, [#allocation6], 128, 128, 8
    $region9: #{tpu_custom_call.1} parent=1 // pred_fallthru
      _
    // Predicated region
    $region10: #{tpu_custom_call.1} parent=1 // pred_check
      _
    $region11: #{tpu_custom_call.1} parent=1 // pred_check_branch
      %36 = sbr.rel (0) target = $region13
    $region12: #{tpu_custom_call.1} parent=1 // pred_region
      _
    $region13: #{tpu_custom_call.1} parent=1 // pred_fallthru
      _
    // Predicated region
    $region14: #{tpu_custom_call.1} parent=1 // pred_check
      _
    $region15: #{tpu_custom_call.1} parent=1 // pred_check_branch
      %38 = sbr.rel (0) target = $region17
    $region16: #{tpu_custom_call.1} parent=1 // pred_region
      %39 = dma.done [#allocation3], 256
    $region17: #{tpu_custom_call.1} parent=1 // pred_fallthru
      _
    // Predicated region
    $region18: #{tpu_custom_call.1} parent=1 // pred_check
      _
    $region19: #{tpu_custom_call.1} parent=1 // pred_check_branch
      %41 = sbr.rel (0) target = $region21
    $region20: #{tpu_custom_call.1} parent=1 // pred_region
      %42 = dma.done [#allocation6], 512
    $region21: #{tpu_custom_call.1} parent=1 // pred_fallthru
      _
    %v43 = vld [vmem:[#allocation2] sm:$0xff]
    %v44 = vld [vmem:[#allocation2 + $0x8] sm:$0xff]
    %v45 = vld [vmem:[#allocation5] sm:$0xff]
    %v46 = vld [vmem:[#allocation5 + $0x8] sm:$0xff]
    %v47 = vld [vmem:[#allocation5 + $0x10] sm:$0xff]
    %v48 = vld [vmem:[#allocation5 + $0x18] sm:$0xff]
    %v49 = vld [vmem:[%s2] sm:$0x1]
    %v51 = vlaneseq
    %v52 = vshrl.u32 %v51, 7
    %v53 = vsub.s32 0, %v52
    %v54 = vrot.slane %v49, %v53
    %vm56 = vcmask 261120
    %v58 = vsel %vm56, %v43, 0
    %v61 = vsel %vm56, %v44, 0
    %63 = vmatprep.subr.mxu0 0.0
    %64 = vmatpush1.msra.mxu0 %v45
    %65 = vmatprep.subr.mxu0 0.0
    %66 = vmatpush1.msra.mxu0 %v46
    %67 = vmatprep.subr.mxu0 0.0
    %68 = vmatpush1.msra.mxu0 %v47
    %69 = vmatprep.subr.mxu0 0.0
    %70 = vmatpush1.msra.mxu0 %v48
    %71 = vmatprep.subr.mxu0 0.0
    %72 = vmatpush1.msra.mxu0 0.0
    %73 = vmatprep.subr.mxu0 0.0
    %74 = vmatpush1.msra.mxu0 0.0
    %75 = vmatprep.subr.mxu0 0.0
    %76 = vmatpush1.msra.mxu0 0.0
    %77 = vmatprep.subr.mxu0 0.0
    %78 = vmatpush1.msra.mxu0 0.0
    %79 = vmatprep.subr.mxu0 0.0
    %80 = vmatpush1.msra.mxu0 0.0
    %81 = vmatprep.subr.mxu0 0.0
    %82 = vmatpush1.msra.mxu0 0.0
    %83 = vmatprep.subr.mxu0 0.0
    %84 = vmatpush1.msra.mxu0 0.0
    %85 = vmatprep.subr.mxu0 0.0
    %86 = vmatpush1.msra.mxu0 0.0
    %87 = vmatprep.subr.mxu0 0.0
    %88 = vmatpush1.msra.mxu0 0.0
    %89 = vmatprep.subr.mxu0 0.0
    %90 = vmatpush1.msra.mxu0 0.0
    %91 = vmatprep.subr.mxu0 0.0
    %92 = vmatpush1.msra.mxu0 0.0
    %93 = vmatprep.subr.mxu0 0.0
    %94 = vmatpush1.msra.mxu0 0.0
    %95 = vmatprep.subr.mxu0 0.0
    %96 = vmatpush1.msra.mxu0 0.0
    %97 = vmatprep.subr.mxu0 0.0
    %98 = vmatpush1.msra.mxu0 0.0
    %99 = vmatprep.subr.mxu0 0.0
    %100 = vmatpush1.msra.mxu0 0.0
    %101 = vmatprep.subr.mxu0 0.0
    %102 = vmatpush1.msra.mxu0 0.0
    %103 = vmatprep.subr.mxu0 0.0
    %104 = vmatpush1.msra.mxu0 0.0
    %105 = vmatprep.subr.mxu0 0.0
    %106 = vmatpush1.msra.mxu0 0.0
    %107 = vmatprep.subr.mxu0 0.0
    %108 = vmatpush1.msra.mxu0 0.0
    %109 = vmatprep.subr.mxu0 0.0
    %110 = vmatpush1.msra.mxu0 0.0
    %111 = vmatprep.subr.mxu0 0.0
    %112 = vmatpush1.msra.mxu0 0.0
    %113 = vmatprep.subr.mxu0 0.0
    %114 = vmatpush1.msra.mxu0 0.0
    %115 = vmatprep.subr.mxu0 0.0
    %116 = vmatpush1.msra.mxu0 0.0
    %117 = vmatprep.subr.mxu0 0.0
    %118 = vmatpush1.msra.mxu0 0.0
    %119 = vmatprep.subr.mxu0 0.0
    %120 = vmatpush1.msra.mxu0 0.0
    %121 = vmatprep.subr.mxu0 0.0
    %122 = vmatpush1.msra.mxu0 0.0
    %123 = vmatprep.subr.mxu0 0.0
    %124 = vmatpush1.msra.mxu0 0.0
    %125 = vmatprep.subr.mxu0 0.0
    %126 = vmatpush1.msra.mxu0 0.0
    %127 = vmatprep.mubr.f32.mxu0 0.0
    %128 = vmatmul.mubr.f32.gmra.mrb[0].mxu0 %v58
    %v129 = vpop.f32.mrb[0].mxu0
    %v130 = vadd.f32 %v54, %v129
    %v131 = vpop.f32.mrb[0].mxu0
    %132 = vmatprep.mubr.f32.mxu0 0.0
    %133 = vmatmul.mubr.f32.gmra.mrb[0].mxu0 %v61
    %v134 = vpop.f32.mrb[0].mxu0
    %v135 = vadd.f32 %v54, %v134
    %v136 = vpop.f32.mrb[0].mxu0
    %137 = vdwg.mxu0
    %138 = vst.msk [vmem:[#allocation7] sm:$0xff] %vm56, %v130
    %139 = vst.msk [vmem:[#allocation7 + $0x8] sm:$0xff] %vm56, %v135
    // Predicated region
    $region22: #{tpu_custom_call.1} parent=1 // pred_check
      _
    $region23: #{tpu_custom_call.1} parent=1 // pred_check_branch
      %141 = sbr.rel (0) target = $region25
    $region24: #{tpu_custom_call.1} parent=1 // pred_region
      %s143 = ssub.s32 256, 256
      %144 = vsyncadd [#allocation4], %s143
      %s145 = sshll.u32 [#allocation7], 4
      %s146 = int_to_ptr.vmem [resolvable:$true] %s145
      %151 = dma.vmem_to_hbm [thread:$0]  %s146, 256, %s3, [#allocation4], 128, 128, 8
    $region25: #{tpu_custom_call.1} parent=1 // pred_fallthru
      _
    // Predicated region
    $region26: #{tpu_custom_call.1} parent=1 // pred_check
      _
    $region27: #{tpu_custom_call.1} parent=1 // pred_check_branch
      %153 = sbr.rel (0) target = $region29
    $region28: #{tpu_custom_call.1} parent=1 // pred_region
      %154 = dma.done [#allocation4], 256
    $region29: #{tpu_custom_call.1} parent=1 // pred_fallthru
      _
    %155 = vsyncpa [#allocation3], 1
    %156 = vsyncpa [#allocation6], 1
    %157 = vsyncpa [#allocation4], 1

</llo_original>
